<compile_context>
chip_gen: v6e
topology: v6e:2x2x1
jax: 0.10.0
libtpu: 0.0.40
codegen_flags: <defaults>
</compile_context>

<pallas_src>
import jax
import jax.numpy as jnp
from jax.experimental import pallas as pl
from jax.experimental.pallas import tpu as pltpu


def _cdiv(a, b):
    return -(-a // b)


def _round_up(a, b):
    return _cdiv(a, b) * b


def _vmem_capacity_bytes():
    try:
        return int(pltpu.get_tpu_info().vmem_capacity_bytes)
    except Exception:
        return 64 << 20  # conservative per-core default (v7x)


def _corr_taps(x_ref, w, b, kh, kw, row0, rows, w_out):
    """Shifted multiply-accumulate taps (+ bias) over `rows` output rows.

    `row0` is the *static* row offset of the first needed input row inside the
    current VMEM block; all slices are plain static VMEM vector loads."""
    def tap(i, j):
        return x_ref[row0 + i:row0 + i + rows, j:j + w_out].astype(jnp.float32)

    acc = w[0] * tap(0, 0) + b  # bias folded into the first tap
    for t in range(1, kh * kw):
        i, j = divmod(t, kw)
        acc = acc + w[t] * tap(i, j)
    return acc


def _make_single_kernel(kh, kw, h_out, w_out):
    def kernel(w_ref, b_ref, x_ref, y_ref):
        w = [w_ref[t] for t in range(kh * kw)]
        y_ref[...] = _corr_taps(x_ref, w, b_ref[0], kh, kw, 0, h_out, w_out)
    return kernel


def _make_tiled_kernel(kh, kw, tile_h, w_out, n_tiles, slack, overshoot, d_prev):
    """Row-tiled kernel.  The input block carries a (tile_h + halo_h)-row halo
    window whose start is clamped at the bottom edge; `slack`, `overshoot` and
    `d_prev` are the static row shifts that make the (at most two) clamped
    trailing tiles read the right rows without any OOB access."""
    valid_last = tile_h - overshoot
    clamped = (slack > 0) or (overshoot > 0)  # last tile's window is clamped

    def kernel(w_ref, b_ref, x_ref, y_ref):
        # Hoist scalar weight/bias reads (SMEM -> sreg) out of the tap loop.
        w = [w_ref[t] for t in range(kh * kw)]
        b = b_ref[0]

        def acc(row0):
            return _corr_taps(x_ref, w, b, kh, kw, row0, tile_h, w_out)

        if not clamped:
            y_ref[...] = acc(0)
            return

        i = pl.program_id(0)
        last = n_tiles - 1

        if d_prev == 0:
            @pl.when(i < last)
            def _():
                y_ref[...] = acc(0)
        else:
            @pl.when(i < last - 1)
            def _():
                y_ref[...] = acc(0)

            @pl.when(i == last - 1)
            def _():
                y_ref[...] = acc(d_prev)

        @pl.when(i == last)
        def _():
            # Clamped window: compute output rows [h_out - tile_h, h_out) and
            # drop the first `overshoot` rows (they belong to the previous
            # tile); rows past h_out are never written.
            res = acc(slack)
            if overshoot == 0:
                y_ref[...] = res
            else:
                y_ref[0:valid_last, :] = res[overshoot:, :]

    return kernel


def _choose_tile_h(tile_h, h_out, H, W, w_out, halo_h, row_align, itemsize,
                   vmem_cap):
    if tile_h is None:
        # ~4 MiB f32 output tiles on v7x (64 MiB/TC), ~8 MiB on v5e/v6e.
        target = (4 << 20) if vmem_cap <= (64 << 20) else (8 << 20)
        tile_h = target // (4 * max(w_out, 1))
    tile_h = max(row_align, _round_up(int(tile_h), row_align))
    # >= 2 grid steps whenever h_out permits (v7x megacore: 2 TCs/chip).
    two_step = _round_up(_cdiv(h_out, 2), row_align)
    tile_h = min(tile_h, max(row_align, two_step))
    # Keep the halo'd input window inside the (unpadded) image rows.
    fit_rows = ((H - halo_h) // row_align) * row_align
    if fit_rows >= row_align:
        tile_h = min(tile_h, fit_rows)
    # Double-buffered in/out blocks + f32 accumulator <= ~45% of per-core VMEM.
    budget = int(0.45 * vmem_cap) - 2 * halo_h * W * itemsize
    per_row = 2 * W * itemsize + 3 * w_out * 4
    if budget > per_row * row_align:
        tile_h = min(tile_h, ((budget // per_row) // row_align) * row_align)
    else:
        tile_h = row_align
    return tile_h


def conv2d_forward(x, weight, bias, *, tile_h=None):
    """Pallas equivalent of Conv2D.forward: corr2d(x, weight) + bias."""
    if x.dtype not in (jnp.float32, jnp.bfloat16):
        x = x.astype(jnp.float32)            # ints etc.; f32/bf16 stay native
    weight = weight.astype(jnp.float32)
    bias = bias.astype(jnp.float32)

    H, W = x.shape
    kh, kw = weight.shape
    h_out, w_out = H - kh + 1, W - kw + 1
    itemsize = jnp.dtype(x.dtype).itemsize
    row_align = 8 if itemsize == 4 else 16   # sublane packing granularity

    vmem_cap = _vmem_capacity_bytes()
    halo_h = _round_up(kh - 1, row_align)    # aligned row halo
    tile_h = _choose_tile_h(tile_h, h_out, H, W, w_out, halo_h, row_align,
                            itemsize, vmem_cap)
    in_tile_h = tile_h + halo_h
    n_tiles = _cdiv(h_out, tile_h)

    w_flat = weight.reshape(-1)              # 1-D SMEM (avoids 2-D padding)

    if n_tiles < 2 or H < in_tile_h:
        # Single-block path: whole image + output + accumulator live in VMEM.
        need = H * W * itemsize + 3 * h_out * w_out * 4
        vmem_limit = int(min(0.9 * vmem_cap, max(16 << 20, need + (4 << 20))))
        return pl.pallas_call(
            _make_single_kernel(kh, kw, h_out, w_out),
            out_shape=jax.ShapeDtypeStruct((h_out, w_out), jnp.float32),
            grid=(1,),
            in_specs=[
                pl.BlockSpec(memory_space=pltpu.MemorySpace.SMEM),  # weight
                pl.BlockSpec(memory_space=pltpu.MemorySpace.SMEM),  # bias
                pl.BlockSpec((H, W), lambda i: (0, 0)),
            ],
            out_specs=pl.BlockSpec((h_out, w_out), lambda i: (0, 0)),
            compiler_params=pltpu.CompilerParams(
                dimension_semantics=("arbitrary",),
                vmem_limit_bytes=vmem_limit,
            ),
        )(w_flat, bias, x)

    # Tiled path.  Static bottom-edge bookkeeping: the last (and at most the
    # second-to-last) input window gets clamped so it ends exactly at row H.
    slack = halo_h - (kh - 1)
    overshoot = n_tiles * tile_h - h_out                 # ragged out-tile rows
    d_last = (n_tiles - 1) * tile_h + in_tile_h - H      # > 0 -> clamp needed
    d_prev = max(0, (n_tiles - 2) * tile_h + in_tile_h - H)

    if d_last > 0:
        def x_index_map(i):
            return (jnp.minimum(i * tile_h, H - in_tile_h), 0)
    else:
        def x_index_map(i):
            return (i * tile_h, 0)

    in_block = in_tile_h * W * itemsize
    out_block = tile_h * w_out * 4
    need = 2 * in_block + 3 * out_block       # dbl-buffered in/out + f32 acc
    vmem_limit = int(min(0.6 * vmem_cap, max(16 << 20, need + (4 << 20))))

    kernel = _make_tiled_kernel(kh, kw, tile_h, w_out, n_tiles, slack,
                                overshoot, d_prev if d_last > 0 else 0)
    return pl.pallas_call(
        kernel,
        out_shape=jax.ShapeDtypeStruct((h_out, w_out), jnp.float32),
        grid=(n_tiles,),
        in_specs=[
            pl.BlockSpec(memory_space=pltpu.MemorySpace.SMEM),   # weight
            pl.BlockSpec(memory_space=pltpu.MemorySpace.SMEM),   # bias
            # Overlapping row-halo window: Element row dim, full-width columns.
            pl.BlockSpec((pl.Element(in_tile_h), W), x_index_map),
        ],
        out_specs=pl.BlockSpec((tile_h, w_out), lambda i: (i, 0)),
        compiler_params=pltpu.CompilerParams(
            dimension_semantics=("parallel",),
            vmem_limit_bytes=vmem_limit,
        ),
    )(w_flat, bias, x)


def _corr2d_ref(x, k):
    """Pure-JAX reference of the PyTorch corr2d for correctness checks."""
    kh, kw = k.shape
    h_out, w_out = x.shape[0] - kh + 1, x.shape[1] - kw + 1
    acc = jnp.zeros((h_out, w_out), jnp.float32)
    for i in range(kh):
        for j in range(kw):
            acc = acc + k[i, j] * x[i:i + h_out, j:j + w_out]
    return acc


if __name__ == "__main__":
    key = jax.random.PRNGKey(0)
    k_w2, k_b2, k_x2, k_x3, k_w3, k_b3 = jax.random.split(key, 6)

    # --- Test 1: faithful to the d2l script: K = [[1, -1]], X = ones(6, 8) ---
    weight = jnp.array([[1.0, -1.0]], dtype=jnp.float32)
    bias = jnp.array([0.5], dtype=jnp.float32)
    x = jnp.ones((6, 8), dtype=jnp.float32)
    y = jax.block_until_ready(conv2d_forward(x, weight, bias))
    y_ref = _corr2d_ref(x, weight) + bias[0]
    assert y.shape == (6, 7), y.shape
    assert jnp.allclose(y, y_ref, atol=1e-5, rtol=1e-5)

    # --- Test 2: larger image + (3, 5) kernel, default tiling: >= 2 grid
    #             steps, clamped bottom-edge halo, ragged last output tile. ---
    weight2 = jax.random.normal(k_w2, (3, 5), dtype=jnp.float32)
    bias2 = jax.random.normal(k_b2, (1,), dtype=jnp.float32)
    x2 = jax.random.normal(k_x2, (200, 260), dtype=jnp.float32)
    y2 = jax.block_until_ready(conv2d_forward(x2, weight2, bias2))
    y2_ref = _corr2d_ref(x2, weight2) + bias2[0]
    assert y2.shape == (198, 256), y2.shape
    assert jnp.allclose(y2, y2_ref, atol=1e-3, rtol=1e-3)

    # --- Test 2b: explicit small tile -> deeper grid, same clamp machinery ---
    y2b = jax.block_until_ready(conv2d_forward(x2, weight2, bias2, tile_h=32))
    assert y2b.shape == (198, 256), y2b.shape
    assert jnp.allclose(y2b, y2_ref, atol=1e-3, rtol=1e-3)

    # --- Test 3: bf16 input DMA'd natively, upcast to f32 inside the kernel ---
    x3 = jax.random.normal(k_x3, (20, 40), dtype=jnp.float32).astype(jnp.bfloat16)
    weight3 = jax.random.normal(k_w3, (2, 3), dtype=jnp.float32)
    bias3 = jax.random.normal(k_b3, (1,), dtype=jnp.float32)
    y3 = jax.block_until_ready(conv2d_forward(x3, weight3, bias3))
    y3_ref = _corr2d_ref(x3.astype(jnp.float32), weight3) + bias3[0]
    assert y3.shape == (19, 38), y3.shape
    assert jnp.allclose(y3, y3_ref, atol=1e-4, rtol=1e-4)

    print("KERNEL_OK")
</pallas_src>

<mosaic_0001>
module attributes {stable_mosaic.version = 11 : i64} {
  func.func @kernel(%arg0: i32, %arg1: memref<2xf32, #tpu.memory_space<smem>>, %arg2: memref<1xf32, #tpu.memory_space<smem>>, %arg3: memref<6x8xf32, #tpu.memory_space<vmem>>, %arg4: memref<6x7xf32, #tpu.memory_space<vmem>>) attributes {dimension_semantics = [#tpu.dimension_semantics<arbitrary>], iteration_bounds = array<i64: 1>, scalar_prefetch = 0 : i64, scratch_operands = 0 : i64, tpu.core_type = #tpu.core_type<tc>, window_params = [{transform_indices = @transform_0, window_bounds = array<i64: 2>}, {transform_indices = @transform_1, window_bounds = array<i64: 1>}, {pipeline_mode = #tpu.pipeline_mode<synchronous>, transform_indices = @transform_2, window_bounds = array<i64: 6, 8>}, {pipeline_mode = #tpu.pipeline_mode<synchronous>, transform_indices = @transform_3, window_bounds = array<i64: 6, 7>}]} {
    %c0 = arith.constant 0 : index
    %0 = memref.load %arg1[%c0] : memref<2xf32, #tpu.memory_space<smem>>
    %c1 = arith.constant 1 : index
    %1 = memref.load %arg1[%c1] : memref<2xf32, #tpu.memory_space<smem>>
    %c0_0 = arith.constant 0 : index
    %2 = memref.load %arg2[%c0_0] : memref<1xf32, #tpu.memory_space<smem>>
    %c0_1 = arith.constant 0 : index
    %c0_2 = arith.constant 0 : index
    %3 = vector.load %arg3[%c0_1, %c0_2] : memref<6x8xf32, #tpu.memory_space<vmem>>, vector<6x7xf32>
    %4 = vector.broadcast %0 : f32 to vector<6x7xf32>
    %5 = arith.mulf %4, %3 : vector<6x7xf32>
    %6 = vector.broadcast %2 : f32 to vector<6x7xf32>
    %7 = arith.addf %5, %6 : vector<6x7xf32>
    %c0_3 = arith.constant 0 : index
    %c1_4 = arith.constant 1 : index
    %8 = vector.load %arg3[%c0_3, %c1_4] : memref<6x8xf32, #tpu.memory_space<vmem>>, vector<6x7xf32>
    %9 = vector.broadcast %1 : f32 to vector<6x7xf32>
    %10 = arith.mulf %9, %8 : vector<6x7xf32>
    %11 = arith.addf %7, %10 : vector<6x7xf32>
    %c0_5 = arith.constant 0 : index
    %c0_6 = arith.constant 0 : index
    %12 = vector.load %arg4[%c0_5, %c0_6] : memref<6x7xf32, #tpu.memory_space<vmem>>, vector<6x7xf32>
    tpu.vector_store %arg4[%c0_5, %c0_6], %11 {strides = array<i32>} : memref<6x7xf32, #tpu.memory_space<vmem>>, vector<6x7xf32>,
    return
  }
  func.func @transform_0(%arg0: i32) -> i32 {
    %c0_i32 = arith.constant 0 : i32
    %c0_i32_0 = arith.constant 0 : i32
    return %c0_i32 : i32
  }
  func.func @transform_1(%arg0: i32) -> i32 {
    %c0_i32 = arith.constant 0 : i32
    %c0_i32_0 = arith.constant 0 : i32
    return %c0_i32 : i32
  }
  func.func @transform_2(%arg0: i32) -> (i32, i32) {
    %c0_i32 = arith.constant 0 : i32
    %c0_i32_0 = arith.constant 0 : i32
    %c0_i32_1 = arith.constant 0 : i32
    return %c0_i32, %c0_i32_0 : i32, i32
  }
  func.func @transform_3(%arg0: i32) -> (i32, i32) {
    %c0_i32 = arith.constant 0 : i32
    %c0_i32_0 = arith.constant 0 : i32
    %c0_i32_1 = arith.constant 0 : i32
    return %c0_i32, %c0_i32_0 : i32, i32
  }
}

</mosaic_0001>

<llo_original>
// kernel: tpu_custom_call.1
$region0: #{tpu_custom_call.1}
  #allocation0 [shape = 'u32[]', space=smem, size = 0x4, offset = 0x4, fixed_abs, tag = 'smem constant byte address 0x4 - core index']
  #allocation1 [shape = 'u32[144,128]{1,0:T(1,128)}', space=vmem, size = 0x12000, scoped, tag = 'internal scratch']
  #allocation2 [shape = 'f32[1]{0:T(128)S(6)}', space=smem, size = 0x200, scoped, tag = 'scoped memory for tpu_custom_call.1']
  %s0 = inlined_call_operand.vmem [shape: f32[2], index: 0, kind: input, shape index: {}]
  %s1 = inlined_call_operand.<no memory space> [shape: f32[1], index: 1, kind: input, shape index: {}]
  %s2 = inlined_call_operand.hbm [shape: f32[6,8], index: 2, kind: input, shape index: {}]
  %s3 = inlined_call_operand.hbm [shape: f32[6,7], index: 3, kind: output, shape index: {}]
  %s4 = sld [smem:[#allocation0]]
  $region30: #{tpu_custom_call.1} parent=0
    _
  %s6 = ssub.s32 1, %s4
  %s7 = scalar_select 0, %s6, %s4
  %8 = sst [smem:[#allocation2]] %s1
  $region1: #{tpu_custom_call.1} parent=0
    #allocation3 [shape = 'u8[512]{0}', space=smem, size = 0x200, scoped, tag = 'input window, operand 0, single buffered']
    #allocation4 [shape = 's32[1]{0}', space=sflag, size = 0x4, scoped, tag = 'scoped memory for tpu_custom_call.1']
    #allocation5 [shape = 's32[1]{0}', space=sflag, size = 0x4, scoped, tag = 'scoped memory for tpu_custom_call.1']
    #allocation6 [shape = 's32[1]{0}', space=sflag, size = 0x4, scoped, tag = 'scoped memory for tpu_custom_call.1']
    #allocation7 [shape = 'u8[4096]{0}', space=vmem, size = 0x1000, scoped, tag = 'input window, operand 2, single buffered']
    #allocation8 [shape = 'u8[4096]{0}', space=vmem, size = 0x1000, scoped, tag = 'output window, operand 0, single buffered']
    %9 = vsyncpa [#allocation6], 0
    %10 = vsyncpa [#allocation4], 0
    %11 = vsyncpa [#allocation5], 0
    // Predicated region
    $region2: #{tpu_custom_call.1} parent=1 // pred_check
      _
    $region3: #{tpu_custom_call.1} parent=1 // pred_check_branch
      %13 = sbr.rel (0) target = $region5
    $region4: #{tpu_custom_call.1} parent=1 // pred_region
      %s15 = ssub.s32 16, 16
      %16 = vsyncadd [#allocation6], %s15
      %s18 = sshll.u32 %s0, 4
      %s19 = int_to_ptr.vmem [resolvable:$true] %s18
      %21 = dma.vmem_to_smem %s19, 16, [#allocation3], [#allocation6]
    $region5: #{tpu_custom_call.1} parent=1 // pred_fallthru
      _
    // Predicated region
    $region6: #{tpu_custom_call.1} parent=1 // pred_check
      _
    $region7: #{tpu_custom_call.1} parent=1 // pred_check_branch
      %23 = sbr.rel (0) target = $region9
    $region8: #{tpu_custom_call.1} parent=1 // pred_region
      _
    $region9: #{tpu_custom_call.1} parent=1 // pred_fallthru
      _
    // Predicated region
    $region10: #{tpu_custom_call.1} parent=1 // pred_check
      _
    $region11: #{tpu_custom_call.1} parent=1 // pred_check_branch
      %25 = sbr.rel (0) target = $region13
    $region12: #{tpu_custom_call.1} parent=1 // pred_region
      %s27 = ssub.s32 128, 128
      %28 = vsyncadd [#allocation4], %s27
      %s30 = sshll.u32 [#allocation7], 4
      %s31 = int_to_ptr.vmem [resolvable:$true] %s30
      %33 = dma.hbm_to_vmem [thread:$0]  %s2, 128, %s31, [#allocation4]
    $region13: #{tpu_custom_call.1} parent=1 // pred_fallthru
      _
    // Predicated region
    $region14: #{tpu_custom_call.1} parent=1 // pred_check
      _
    $region15: #{tpu_custom_call.1} parent=1 // pred_check_branch
      %35 = sbr.rel (0) target = $region17
    $region16: #{tpu_custom_call.1} parent=1 // pred_region
      %36 = dma.done [#allocation6], 16
    $region17: #{tpu_custom_call.1} parent=1 // pred_fallthru
      _
    // Predicated region
    $region18: #{tpu_custom_call.1} parent=1 // pred_check
      _
    $region19: #{tpu_custom_call.1} parent=1 // pred_check_branch
      %38 = sbr.rel (0) target = $region21
    $region20: #{tpu_custom_call.1} parent=1 // pred_region
      %39 = dma.done [#allocation4], 128
    $region21: #{tpu_custom_call.1} parent=1 // pred_fallthru
      _
    %40 = sfence
    %s41 = sld [smem:[#allocation3]]
    %s42 = sld [smem:[#allocation3 + $0x1]]
    %s43 = sld [smem:[#allocation2]]
    %v44 = vld [vmem:[#allocation7] sm:$0x3f]
    %v45 = vstv %s41
    %v46 = vmul.f32 %v45, %v44
    %v47 = vstv %s43
    %v48 = vadd.f32 %v46, %v47
    %v49 = vstv %s42
    %v50 = vmul.f32 %v49, %v44
    %52 = vrot.lane.b32.xlu0 %v50, 127
    %v53 = vpop.permute.xlu0 %52
    %v55 = vadd.f32 %v48, %v53
    %vm56 = vcmask 54272
    %57 = vst.msk [vmem:[#allocation8] sm:$0x3f] %vm56, %v55
    // Predicated region
    $region22: #{tpu_custom_call.1} parent=1 // pred_check
      _
    $region23: #{tpu_custom_call.1} parent=1 // pred_check_branch
      %59 = sbr.rel (0) target = $region25
    $region24: #{tpu_custom_call.1} parent=1 // pred_region
      %s61 = ssub.s32 128, 128
      %62 = vsyncadd [#allocation5], %s61
      %s64 = sshll.u32 [#allocation8], 4
      %s65 = int_to_ptr.vmem [resolvable:$true] %s64
      %67 = dma.vmem_to_hbm [thread:$0]  %s65, 128, %s3, [#allocation5]
    $region25: #{tpu_custom_call.1} parent=1 // pred_fallthru
      _
    // Predicated region
    $region26: #{tpu_custom_call.1} parent=1 // pred_check
      _
    $region27: #{tpu_custom_call.1} parent=1 // pred_check_branch
      %69 = sbr.rel (0) target = $region29
    $region28: #{tpu_custom_call.1} parent=1 // pred_region
      %70 = dma.done [#allocation5], 128
    $region29: #{tpu_custom_call.1} parent=1 // pred_fallthru
      _
    %71 = vsyncpa [#allocation4], 1
    %72 = vsyncpa [#allocation5], 1
    %73 = vsyncpa [#allocation6], 1

</llo_original>
